<compile_context>
chip_gen: v6e
topology: v6e:2x2x1
jax: 0.10.0
libtpu: 0.0.40
codegen_flags: <defaults>
</compile_context>

<pallas_src>
import functools

import jax
import jax.numpy as jnp
from jax.experimental import pallas as pl
from jax.experimental.pallas import tpu as pltpu


def _conv_relu_kernel(x_ref, b_ref, o_ref, xp_ref, *, kh_size, h_in, h_out, pad_h):
    # x_ref : (1, H, W*Cin)            bf16  unpadded input row-slab for one batch element
    # b_ref : (KH*W*Cin, Wo*Cout)      bf16  banded (Toeplitz-expanded) weight
    # o_ref : (1, Ho, Wo*Cout)         f32   lane-dense output slab
    # xp_ref: (H + 2*pad_h, W*Cin)     bf16  VMEM scratch holding the H-padded image

    # Fused zero-padding along H: zero the scratch, then drop the image into the interior.
    # (Unconditional each step so it is correct regardless of how the parallel grid is sharded.)
    xp_ref[...] = jnp.zeros_like(xp_ref)
    xp_ref[pad_h:pad_h + h_in, :] = x_ref[0]

    # Build the matmul LHS: A[h, kh*(W*Cin) + w*Cin + c] = x_padded[h + kh, w, c].
    # This is just KH sublane-shifted slices concatenated along the lane axis -> K = KH*W*Cin.
    lhs = jnp.concatenate(
        [xp_ref[k:k + h_out, :] for k in range(kh_size)], axis=1)

    # Single MXU call per batch element: (Ho, K) @ (K, Wo*Cout), f32 accumulation.
    acc = jnp.dot(lhs, b_ref[...], preferred_element_type=jnp.float32)

    # Fused ReLU (f32), lane-dense store.
    o_ref[0] = jnp.maximum(acc, 0.0).astype(o_ref.dtype)


def conv2d_same_padding_relu(x_nchw, weight_oihw, *, stride=1):
    """Equivalent of Conv2dSamePadding.forward: conv2d(padding=(k-1)//2, bias=False) + ReLU.

    x_nchw:      (N, Cin, H, W)
    weight_oihw: (Cout, Cin, KH, KW)   (PyTorch Conv2d weight layout)
    returns:     (N, Cout, Ho, Wo)     (NCHW, like PyTorch)
    """
    assert stride == 1  # TODO(synk): generalize to stride > 1
    n, cin, h, w = x_nchw.shape
    cout, cin_w, kh, kw = weight_oihw.shape
    assert cin == cin_w

    pad_h = (kh - 1) // 2
    pad_w = (kw - 1) // 2
    h_out = h + 2 * pad_h - kh + 1
    w_out = w + 2 * pad_w - kw + 1
    hp = h + 2 * pad_h
    k_dim = kh * w * cin

    compute_dtype = jnp.bfloat16  # MXU-native on v5e/v6e/v7x; accumulation stays f32.

    # Input glue: NCHW -> (N, H, W*Cin) bf16.  transpose+reshape+cast fuse into one XLA pass;
    # no jnp.pad pass (padding is fused into the kernel / the banded weight).
    x2 = jnp.transpose(x_nchw, (0, 2, 3, 1)).reshape(n, h, w * cin).astype(compute_dtype)

    # Weight glue: expand the (tiny) kernel into a banded matrix so the conv's W dimension and
    # all taps live in a single matmul.  W-padding is folded in here.
    #   B[(kh, w_in, c), (w_out, co)] = Wt[kh, w_in - w_out + pad_w, c, co]  if that tap exists.
    w_hwio = jnp.transpose(weight_oihw, (2, 3, 1, 0)).astype(compute_dtype)  # (KH, KW, Cin, Cout)
    w_src = jnp.arange(w)[:, None]        # input column  w_in   (W, 1)
    w_dst = jnp.arange(w_out)[None, :]    # output column w_out  (1, Wo)
    tap = w_src - w_dst + pad_w           # (W, Wo): which kw tap connects them
    valid = (tap >= 0) & (tap < kw)
    tap_c = jnp.clip(tap, 0, kw - 1)
    w_expand = w_hwio[:, tap_c, :, :]                                  # (KH, W, Wo, Cin, Cout)
    w_expand = jnp.where(valid[None, :, :, None, None], w_expand, 0)
    b_mat = jnp.transpose(w_expand, (0, 1, 3, 2, 4)).reshape(k_dim, w_out * cout)

    kernel = functools.partial(
        _conv_relu_kernel, kh_size=kh, h_in=h, h_out=h_out, pad_h=pad_h)

    out2 = pl.pallas_call(
        kernel,
        out_shape=jax.ShapeDtypeStruct((n, h_out, w_out * cout), jnp.float32),
        grid_spec=pltpu.PrefetchScalarGridSpec(
            num_scalar_prefetch=0,
            grid=(n,),
            in_specs=[
                pl.BlockSpec((1, h, w * cin), lambda b: (b, 0, 0)),
                pl.BlockSpec((k_dim, w_out * cout), lambda b: (0, 0)),
            ],
            out_specs=pl.BlockSpec((1, h_out, w_out * cout), lambda b: (b, 0, 0)),
            scratch_shapes=[pltpu.VMEM((hp, w * cin), compute_dtype)],
        ),
        compiler_params=pltpu.CompilerParams(
            dimension_semantics=("parallel",),  # batch axis shards across TCs on v7x
        ),
    )(x2, b_mat)

    # Output glue: (N, Ho, Wo*Cout) -> NCHW.  Reshape is free; one small transpose pass.
    out = out2.reshape(n, h_out, w_out, cout)
    return jnp.transpose(out, (0, 3, 1, 2)).astype(x_nchw.dtype)


if __name__ == "__main__":
    key = jax.random.PRNGKey(0)
    k_x, k_w = jax.random.split(key)

    # Small shapes consistent with the module: N=2, Cin=4, H=W=16, Cout=8, kernel_size=3.
    N, CIN, H, W = 2, 4, 16, 16
    COUT, KS = 8, 3

    x = jax.random.normal(k_x, (N, CIN, H, W), dtype=jnp.float32)
    weight = jax.random.normal(k_w, (COUT, CIN, KS, KS), dtype=jnp.float32) * 0.1

    out = conv2d_same_padding_relu(x, weight, stride=1)
    out = jax.block_until_ready(out)

    # Reference: same math on the same bf16-rounded inputs (f32 accumulation) + ReLU.
    x_bf = x.astype(jnp.bfloat16).astype(jnp.float32)
    w_bf = weight.astype(jnp.bfloat16).astype(jnp.float32)
    ref = jax.lax.conv_general_dilated(
        x_bf, w_bf,
        window_strides=(1, 1),
        padding=[(KS // 2, KS // 2), (KS // 2, KS // 2)],
        dimension_numbers=("NCHW", "OIHW", "NCHW"),
    )
    ref = jnp.maximum(ref, 0.0)

    assert out.shape == ref.shape == (N, COUT, H, W)
    max_err = float(jnp.max(jnp.abs(out - ref)))
    assert jnp.allclose(out, ref, atol=2e-3, rtol=2e-3), max_err

    print("KERNEL_OK")
</pallas_src>

<mosaic_0001>
module attributes {stable_mosaic.version = 11 : i64} {
  func.func @_conv_relu_kernel(%arg0: i32, %arg1: memref<1x16x64xbf16, #tpu.memory_space<vmem>>, %arg2: memref<192x128xbf16, #tpu.memory_space<vmem>>, %arg3: memref<1x16x128xf32, #tpu.memory_space<vmem>>, %arg4: memref<18x64xbf16, #tpu.memory_space<vmem>>) attributes {dimension_semantics = [#tpu.dimension_semantics<parallel>], iteration_bounds = array<i64: 2>, scalar_prefetch = 0 : i64, scratch_operands = 1 : i64, tpu.core_type = #tpu.core_type<tc>, window_params = [{transform_indices = @transform_0, window_bounds = array<i64: 1, 16, 64>}, {pipeline_mode = #tpu.pipeline_mode<synchronous>, transform_indices = @transform_1, window_bounds = array<i64: 192, 128>}, {transform_indices = @transform_2, window_bounds = array<i64: 1, 16, 128>}]} {
    %cst = arith.constant 0.000000e+00 : bf16
    %0 = vector.broadcast %cst : bf16 to vector<18x64xbf16>
    %c0 = arith.constant 0 : index
    %c0_0 = arith.constant 0 : index
    %1 = vector.load %arg4[%c0, %c0_0] : memref<18x64xbf16, #tpu.memory_space<vmem>>, vector<18x64xbf16>
    tpu.vector_store %arg4[%c0, %c0_0], %0 {strides = array<i32>} : memref<18x64xbf16, #tpu.memory_space<vmem>>, vector<18x64xbf16>,
    %c0_1 = arith.constant 0 : index
    %c0_2 = arith.constant 0 : index
    %c0_3 = arith.constant 0 : index
    %2 = vector.load %arg1[%c0_1, %c0_2, %c0_3] : memref<1x16x64xbf16, #tpu.memory_space<vmem>>, vector<1x16x64xbf16>
    %3 = vector.shape_cast %2 : vector<1x16x64xbf16> to vector<16x64xbf16>
    %c1 = arith.constant 1 : index
    %c0_4 = arith.constant 0 : index
    %4 = vector.load %arg4[%c1, %c0_4] : memref<18x64xbf16, #tpu.memory_space<vmem>>, vector<16x64xbf16>
    tpu.vector_store %arg4[%c1, %c0_4], %3 {strides = array<i32>} : memref<18x64xbf16, #tpu.memory_space<vmem>>, vector<16x64xbf16>,
    %c0_5 = arith.constant 0 : index
    %c0_6 = arith.constant 0 : index
    %5 = vector.load %arg4[%c0_5, %c0_6] : memref<18x64xbf16, #tpu.memory_space<vmem>>, vector<16x64xbf16>
    %c1_7 = arith.constant 1 : index
    %c0_8 = arith.constant 0 : index
    %6 = vector.load %arg4[%c1_7, %c0_8] : memref<18x64xbf16, #tpu.memory_space<vmem>>, vector<16x64xbf16>
    %c2 = arith.constant 2 : index
    %c0_9 = arith.constant 0 : index
    %7 = vector.load %arg4[%c2, %c0_9] : memref<18x64xbf16, #tpu.memory_space<vmem>>, vector<16x64xbf16>
    %8 = tpu.concatenate %5, %6, %7 in 1 : vector<16x64xbf16>, vector<16x64xbf16>, vector<16x64xbf16> -> vector<16x192xbf16>
    %c0_10 = arith.constant 0 : index
    %c0_11 = arith.constant 0 : index
    %9 = vector.load %arg2[%c0_10, %c0_11] : memref<192x128xbf16, #tpu.memory_space<vmem>>, vector<192x128xbf16>
    %cst_12 = arith.constant dense<0.000000e+00> : vector<16x128xf32>
    %10 = tpu.matmul %8, %9, %cst_12 {dimension_numbers = #tpu.dot_dimension_numbers<[1], [0], [0], [1], [0, 0, 1, 1], [], []>} : vector<16x192xbf16>, vector<192x128xbf16>, vector<16x128xf32> -> vector<16x128xf32>
    %cst_13 = arith.constant 0.000000e+00 : f32
    %11 = vector.broadcast %cst_13 : f32 to vector<16x128xf32>
    %12 = arith.maximumf %10, %11 : vector<16x128xf32>
    %c0_14 = arith.constant 0 : index
    %c0_15 = arith.constant 0 : index
    %c0_16 = arith.constant 0 : index
    %13 = vector.load %arg3[%c0_14, %c0_15, %c0_16] : memref<1x16x128xf32, #tpu.memory_space<vmem>>, vector<1x16x128xf32>
    %14 = vector.shape_cast %13 : vector<1x16x128xf32> to vector<16x128xf32>
    %15 = vector.shape_cast %12 : vector<16x128xf32> to vector<1x16x128xf32>
    tpu.vector_store %arg3[%c0_14, %c0_15, %c0_16], %15 {strides = array<i32>} : memref<1x16x128xf32, #tpu.memory_space<vmem>>, vector<1x16x128xf32>,
    return
  }
  func.func @transform_0(%arg0: i32) -> (i32, i32, i32) {
    %c0_i32 = arith.constant 0 : i32
    %c0_i32_0 = arith.constant 0 : i32
    %c0_i32_1 = arith.constant 0 : i32
    return %arg0, %c0_i32, %c0_i32_0 : i32, i32, i32
  }
  func.func @transform_1(%arg0: i32) -> (i32, i32) {
    %c0_i32 = arith.constant 0 : i32
    %c0_i32_0 = arith.constant 0 : i32
    %c0_i32_1 = arith.constant 0 : i32
    return %c0_i32, %c0_i32_0 : i32, i32
  }
  func.func @transform_2(%arg0: i32) -> (i32, i32, i32) {
    %c0_i32 = arith.constant 0 : i32
    %c0_i32_0 = arith.constant 0 : i32
    %c0_i32_1 = arith.constant 0 : i32
    return %arg0, %c0_i32, %c0_i32_0 : i32, i32, i32
  }
}

</mosaic_0001>

<llo_original>
// kernel: tpu_custom_call.1
$region0: #{tpu_custom_call.1}
  #allocation0 [shape = 'u32[]', space=smem, size = 0x4, offset = 0x4, fixed_abs, tag = 'smem constant byte address 0x4 - core index']
  #allocation1 [shape = 'u32[144,128]{1,0:T(1,128)}', space=vmem, size = 0x12000, scoped, tag = 'internal scratch']
  #allocation2 [shape = 'bf16[18,64]{1,0:T(8,128)(2,1)}', space=vmem, size = 0x1800, scoped, tag = 'scratch operand']
  %s0 = inlined_call_operand.hbm [shape: bf16[2,16,64], index: 0, kind: input, shape index: {}]
  %s1 = inlined_call_operand.hbm [shape: bf16[192,128], index: 1, kind: input, shape index: {}]
  %s2 = inlined_call_operand.hbm [shape: f32[2,16,128], index: 2, kind: output, shape index: {}]
  %s3 = sld [smem:[#allocation0]]
  $region49: #{tpu_custom_call.1} parent=0
    _
  %s5 = ssub.s32 1, %s3
  %s6 = scalar_select 0, %s5, %s3
  $region1: #{tpu_custom_call.1} parent=0
    #allocation3 [shape = 'u8[8192]{0}', space=vmem, size = 0x2000, scoped, tag = 'input window, operand 0']
    #allocation4 [shape = 's32[2]{0}', space=sflag, size = 0x8, scoped, tag = 'scoped memory for tpu_custom_call.1']
    #allocation5 [shape = 's32[2]{0}', space=sflag, size = 0x8, scoped, tag = 'scoped memory for tpu_custom_call.1']
    #allocation6 [shape = 'u8[49152]{0}', space=vmem, size = 0xc000, scoped, tag = 'input window, operand 1, single buffered']
    #allocation7 [shape = 's32[1]{0}', space=sflag, size = 0x4, scoped, tag = 'scoped memory for tpu_custom_call.1']
    #allocation8 [shape = 'u8[16384]{0}', space=vmem, size = 0x4000, scoped, tag = 'output window, operand 0']
    %7 = vsyncpa [#allocation4], 0
    %s8 = scalar_lea.sflag [#allocation4], 1
    %9 = vsyncpa %s8, 0
    %10 = vsyncpa [#allocation7], 0
    %11 = vsyncpa [#allocation5], 0
    %s12 = scalar_lea.sflag [#allocation5], 1
    %13 = vsyncpa %s12, 0
    loop: start=0, step=1, limit=4
    $region2: #{tpu_custom_call.1} parent=1 // loop_pre_header
      _
    $region3: #{tpu_custom_call.1} parent=1 // loop_header
      %s15 = sphi 0, %s19
      %p16 = scmp.ge.s32.totalorder %s15, 4
      %s25 = sphi 0, %s27
      %s28 = sphi 0, %s25
      %s29 = sphi 0, %s28
      %s45 = sphi 0, %s29
      %s49 = sphi 0, %s49
      %s51 = sphi 0, %s49
      %s52 = sphi 0, %s51
      %s66 = sphi 0, %s52
      %s72 = sphi 0, %s74
      %s75 = sphi 0, %s72
      %s76 = sphi 0, %s75
      %s92 = sphi 0, %s76
    $region4: #{tpu_custom_call.1} parent=1 // loop_header_branch
      %18 = sbr.rel (%p16) target = $region8
    $region5: #{tpu_custom_call.1} parent=1 // loop_body
      %s20 = ssub.s32 %s15, 1
      %s21 = ssub.s32 %s15, 2
      %s22 = sadd.s32 %s15, 1
      %s23 = ssub.s32 %s15, %s22
      %p24 = scmp.eq.s32.totalorder %s23, 0
      %s26 = sadd.s32 %s25, 1
      %s27 = scalar_select %p24, %s25, %s26
      %p30 = pneg %p24
      %p31 = scmp.eq.s32.totalorder %s15, 1
      %p32 = por %p30, %p31
      %p33 = scmp.ne.s32.totalorder %s25, %s28
      %p34 = scmp.eq.s32.totalorder %s15, 0
      %p35 = por %p33, %p34
      %p36 = scmp.ne.s32.totalorder %s25, %s28
      %p37 = scmp.eq.s32.totalorder %s20, 1
      %p38 = por %p36, %p37
      %p39 = scmp.ne.s32.totalorder %s28, %s29
      %p40 = scmp.eq.s32.totalorder %s20, 0
      %p41 = por %p39, %p40
      %p42 = scmp.ne.s32.totalorder %s28, %s29
      %p43 = scmp.eq.s32.totalorder %s21, 1
      %p44 = por %p42, %p43
      %p46 = scmp.ne.s32.totalorder %s29, %s45
      %p47 = scmp.eq.s32.totalorder %s21, 0
      %p48 = por %p46, %p47
      %s50 = sadd.s32 %s49, 1
      %p53 = scmp.eq.s32.totalorder %s15, 1
      %p54 = scmp.ne.s32.totalorder %s49, %s51
      %p55 = scmp.eq.s32.totalorder %s15, 0
      %p56 = por %p54, %p55
      %p57 = scmp.ne.s32.totalorder %s49, %s51
      %p58 = scmp.eq.s32.totalorder %s20, 1
      %p59 = por %p57, %p58
      %p60 = scmp.ne.s32.totalorder %s51, %s52
      %p61 = scmp.eq.s32.totalorder %s20, 0
      %p62 = por %p60, %p61
      %p63 = scmp.ne.s32.totalorder %s51, %s52
      %p64 = scmp.eq.s32.totalorder %s21, 1
      %p65 = por %p63, %p64
      %p67 = scmp.ne.s32.totalorder %s52, %s66
      %p68 = scmp.eq.s32.totalorder %s21, 0
      %p69 = por %p67, %p68
      %s70 = ssub.s32 %s15, %s22
      %p71 = scmp.eq.s32.totalorder %s70, 0
      %s73 = sadd.s32 %s72, 1
      %s74 = scalar_select %p71, %s72, %s73
      %p77 = pneg %p71
      %p78 = scmp.eq.s32.totalorder %s15, 1
      %p79 = por %p77, %p78
      %p80 = scmp.ne.s32.totalorder %s72, %s75
      %p81 = scmp.eq.s32.totalorder %s15, 0
      %p82 = por %p80, %p81
      %p83 = scmp.ne.s32.totalorder %s72, %s75
      %p84 = scmp.eq.s32.totalorder %s20, 1
      %p85 = por %p83, %p84
      %p86 = scmp.ne.s32.totalorder %s75, %s76
      %p87 = scmp.eq.s32.totalorder %s20, 0
      %p88 = por %p86, %p87
      %p89 = scmp.ne.s32.totalorder %s75, %s76
      %p90 = scmp.eq.s32.totalorder %s21, 1
      %p91 = por %p89, %p90
      %p93 = scmp.ne.s32.totalorder %s76, %s92
      %p94 = scmp.eq.s32.totalorder %s21, 0
      %p95 = por %p93, %p94
      %p96 = scmp.le.s32.totalorder 1, %s15
      %p97 = scmp.lt.s32.totalorder %s15, 3
      %p98 = pnand %p96, %p97
      %p99 = pneg %p98
      // Predicated region
      $region9: #{tpu_custom_call.1} parent=5 // pred_check
        _
      $region10: #{tpu_custom_call.1} parent=5 // pred_check_branch
        %101 = sbr.rel (%p98) target = $region12
      $region11: #{tpu_custom_call.1} parent=5 // pred_region
        %s102 = ssub.s32 %s15, 1
        // Predicated region
        $region13: #{tpu_custom_call.1} parent=11 // pred_check
          %p103 = pneg %p62
        $region14: #{tpu_custom_call.1} parent=11 // pred_check_branch
          %105 = sbr.rel (%p103) target = $region16
        $region15: #{tpu_custom_call.1} parent=11 // pred_region
          %s107 = ssub.s32 1536, 1536
          %108 = vsyncadd [#allocation7], %s107
          %s109 = sshll.u32 [#allocation6], 4
          %s110 = int_to_ptr.vmem [resolvable:$true] %s109
          %115 = dma.hbm_to_vmem [thread:$0]  %s1, 1536, %s110, [#allocation7], 64, 64, 4
        $region16: #{tpu_custom_call.1} parent=11 // pred_fallthru
          _
      $region12: #{tpu_custom_call.1} parent=5 // pred_fallthru
        _
      %p116 = scmp.lt.s32.totalorder %s15, 2
      // Predicated region
      $region17: #{tpu_custom_call.1} parent=5 // pred_check
        %p117 = pneg %p116
      $region18: #{tpu_custom_call.1} parent=5 // pred_check_branch
        %119 = sbr.rel (%p117) target = $region20
      $region19: #{tpu_custom_call.1} parent=5 // pred_region
        // Predicated region
        $region21: #{tpu_custom_call.1} parent=19 // pred_check
          %p120 = pneg %p35
        $region22: #{tpu_custom_call.1} parent=19 // pred_check_branch
          %122 = sbr.rel (%p120) target = $region24
        $region23: #{tpu_custom_call.1} parent=19 // pred_region
          %s123 = sand.u32 %s25, 1
          %s124 = scalar_lea.sflag [#allocation4], %s123
          %s125 = sand.u32 %s25, 1
          %s126 = smul.addr %s125, 8
          %s127 = scalar_lea.vmem [#allocation3], %s126
          %s129 = ssub.s32 128, 128
          %130 = vsyncadd %s124, %s129
          %s131 = smul.addr %s15, 2
          %s132 = smul.addr %s131, 64
          %s133 = scalar_lea.hbm %s0, %s132
          %s134 = sshll.u32 %s127, 4
          %s135 = int_to_ptr.vmem [resolvable:$true] %s134
          %140 = dma.hbm_to_vmem [thread:$0]  %s133, 128, %s135, %s124, 64, 64, 4
        $region24: #{tpu_custom_call.1} parent=19 // pred_fallthru
          _
      $region20: #{tpu_custom_call.1} parent=5 // pred_fallthru
        _
      %p141 = scmp.le.s32.totalorder 1, %s15
      %p142 = scmp.lt.s32.totalorder %s15, 3
      %p143 = pnand %p141, %p142
      %p144 = pneg %p143
      // Predicated region
      $region25: #{tpu_custom_call.1} parent=5 // pred_check
        _
      $region26: #{tpu_custom_call.1} parent=5 // pred_check_branch
        %146 = sbr.rel (%p143) target = $region28
      $region27: #{tpu_custom_call.1} parent=5 // pred_region
        %s147 = ssub.s32 %s15, 1
        %s148 = sand.u32 %s28, 1
        %s149 = scalar_lea.sflag [#allocation4], %s148
        %s150 = sand.u32 %s28, 1
        %s151 = smul.addr %s150, 8
        %s152 = scalar_lea.vmem [#allocation3], %s151
        // Predicated region
        $region29: #{tpu_custom_call.1} parent=27 // pred_check
          %p153 = pneg %p41
        $region30: #{tpu_custom_call.1} parent=27 // pred_check_branch
          %155 = sbr.rel (%p153) target = $region32
        $region31: #{tpu_custom_call.1} parent=27 // pred_region
          %156 = dma.done %s149, 128
        $region32: #{tpu_custom_call.1} parent=27 // pred_fallthru
          _
        // Predicated region
        $region33: #{tpu_custom_call.1} parent=27 // pred_check
          %p157 = pneg %p62
        $region34: #{tpu_custom_call.1} parent=27 // pred_check_branch
          %159 = sbr.rel (%p157) target = $region36
        $region35: #{tpu_custom_call.1} parent=27 // pred_region
          %160 = dma.done [#allocation7], 1536
        $region36: #{tpu_custom_call.1} parent=27 // pred_fallthru
          _
        %s161 = sand.u32 %s28, 1
        %s162 = scalar_lea.sflag [#allocation4], %s161
        %s163 = sand.u32 %s28, 1
        %s164 = smul.addr %s163, 8
        %s165 = scalar_lea.vmem [#allocation3], %s164
        %p166 = pneg %p41
        %p167 = pneg %p38
        %p168 = pneg %p62
        %p169 = pneg %p59
        %p170 = pneg %p88
        %p171 = pneg %p85
        %s172 = sand.u32 %s75, 1
        %s173 = scalar_lea.sflag [#allocation5], %s172
        %s174 = sand.u32 %s75, 1
        %s175 = smul.addr %s174, 16
        %s176 = scalar_lea.vmem [#allocation8], %s175
        %vm178 = vcmask 519168
        %179 = vst.msk [vmem:[#allocation2] sm:$0xf] %vm178, 0
        %180 = vst.msk [vmem:[#allocation2 + $0x4] sm:$0xf] %vm178, 0
        %vm181 = vcmask 516096
        %182 = vst.msk [vmem:[#allocation2 + $0x8] sm:$0x1] %vm181, 0
        %v183 = vld [vmem:[%s152] sm:$0xf]
        %v184 = vld [vmem:[%s152 + $0x4] sm:$0xf]
        %vm185 = vsmask.f32 256
        %vm186 = vsmask.f32 4368
        %vm187 = vmor %vm185, %vm186
        %v189 = vshrl.u32 %v183, 16
        %v191 = vrot.slane %v189, 7
        %v192 = vshll.u32 %v183, 16
        %v194 = vor.u32 %v191, %v192
        %v195 = vrot.slane %v191, 4
        %v197 = vshrl.u32 %v184, 16
        %v199 = vrot.slane %v197, 7
        %v200 = vshll.u32 %v184, 16
        %v202 = vor.u32 %v199, %v200
        %v203 = vsel %vm187, %v195, %v202
        %v204 = vrot.slane %v199, 4
        %vm208 = vcmask 519168
        %vm209 = vsmask.f32 7938
        %vm210 = vmand %vm208, %vm209
        %v211 = vld [vmem:[#allocation2] sm:$0xf]
        %v212 = vsel %vm210, %v194, %v211
        %213 = vst [vmem:[#allocation2] sm:$0xf] %v212
        %214 = vst.msk [vmem:[#allocation2 + $0x4] sm:$0xf] %vm178, %v203
        %vm215 = vcmask 516096
        %vm216 = vmand %vm215, %vm185
        %v217 = vld [vmem:[#allocation2 + $0x8] sm:$0x1]
        %v218 = vsel %vm216, %v204, %v217
        %219 = vst [vmem:[#allocation2 + $0x8] sm:$0x1] %v218
        %v220 = vld [vmem:[#allocation2] sm:$0xf]
        %v221 = vld [vmem:[#allocation2 + $0x4] sm:$0xf]
        %v222 = vld [vmem:[#allocation2 + $0x8] sm:$0x1]
        %v223 = vld [vmem:[#allocation2] sm:$0xe]
        %v226 = vunpack.c.l.b16 %v220
        %v227 = vunpack.c.l.b16 %v221
        %v228 = vpack.c.b16 %v227, %v226
        %v230 = vunpack.c.l.b16 %v222
        %v231 = vpack.c.b16 %v230, %v230
        %vm232 = vsmask.f32 7424
        %v234 = vshrl.u32 %v228, 16
        %v236 = vshll.u32 %v228, 16
        %v238 = vrot.slane %v236, 1
        %v239 = vor.u32 %v234, %v238
        %v241 = vshll.u32 %v231, 16
        %v243 = vrot.slane %v241, 1
        %v244 = vsel %vm232, %v239, %v243
        %245 = vrot.lane.b32.xlu0 %v244, 64
        %v246 = vpop.permute.xlu0 %245
        %v248 = vunpack.c.l.b16 %v223
        %v249 = vpack.c.b16 %v227, %v248
        %vm250 = vcmask 1046528
        %v251 = vrot.slane %v249, 1
        %v252 = vrot.slane %v231, 1
        %v253 = vsel %vm250, %v251, %v252
        %vm254 = vcmask 523264
        %v256 = vsel %vm254, %v228, %v246
        %v258 = vld [vmem:[#allocation6] sm:$0xf]
        %v259 = vld [vmem:[#allocation6 + $0x4] sm:$0xf]
        %v260 = vld [vmem:[#allocation6 + $0x8] sm:$0xf]
        %v261 = vld [vmem:[#allocation6 + $0xc] sm:$0xf]
        %v262 = vld [vmem:[#allocation6 + $0x10] sm:$0xf]
        %v263 = vld [vmem:[#allocation6 + $0x14] sm:$0xf]
        %v264 = vld [vmem:[#allocation6 + $0x18] sm:$0xf]
        %v265 = vld [vmem:[#allocation6 + $0x1c] sm:$0xf]
        %v266 = vld [vmem:[#allocation6 + $0x20] sm:$0xf]
        %v267 = vld [vmem:[#allocation6 + $0x24] sm:$0xf]
        %v268 = vld [vmem:[#allocation6 + $0x28] sm:$0xf]
        %v269 = vld [vmem:[#allocation6 + $0x2c] sm:$0xf]
        %v270 = vld [vmem:[#allocation6 + $0x30] sm:$0xf]
        %v271 = vld [vmem:[#allocation6 + $0x34] sm:$0xf]
        %v272 = vld [vmem:[#allocation6 + $0x38] sm:$0xf]
        %v273 = vld [vmem:[#allocation6 + $0x3c] sm:$0xf]
        %v274 = vld [vmem:[#allocation6 + $0x40] sm:$0xf]
        %v275 = vld [vmem:[#allocation6 + $0x44] sm:$0xf]
        %v276 = vld [vmem:[#allocation6 + $0x48] sm:$0xf]
        %v277 = vld [vmem:[#allocation6 + $0x4c] sm:$0xf]
        %v278 = vld [vmem:[#allocation6 + $0x50] sm:$0xf]
        %v279 = vld [vmem:[#allocation6 + $0x54] sm:$0xf]
        %v280 = vld [vmem:[#allocation6 + $0x58] sm:$0xf]
        %v281 = vld [vmem:[#allocation6 + $0x5c] sm:$0xf]
        %v306 = vunpack.c.l.b16 %v258
        %v307 = vunpack.c.l.b16 %v259
        %v308 = vunpack.c.l.b16 %v260
        %v309 = vunpack.c.l.b16 %v261
        %v310 = vunpack.c.l.b16 %v262
        %v311 = vunpack.c.l.b16 %v263
        %v312 = vunpack.c.l.b16 %v264
        %v313 = vunpack.c.l.b16 %v265
        %v314 = vunpack.c.l.b16 %v266
        %v315 = vunpack.c.l.b16 %v267
        %v316 = vunpack.c.l.b16 %v268
        %v317 = vunpack.c.l.b16 %v269
        %v318 = vunpack.c.l.b16 %v270
        %v319 = vunpack.c.l.b16 %v271
        %v320 = vunpack.c.l.b16 %v272
        %v321 = vunpack.c.l.b16 %v273
        %v322 = vunpack.c.l.b16 %v274
        %v323 = vunpack.c.l.b16 %v275
        %v324 = vunpack.c.l.b16 %v276
        %v325 = vunpack.c.l.b16 %v277
        %v326 = vunpack.c.l.b16 %v278
        %v327 = vunpack.c.l.b16 %v279
        %v328 = vunpack.c.l.b16 %v280
        %v329 = vunpack.c.l.b16 %v281
        %v330 = vpack.c.b16 %v307, %v306
        %v331 = vpack.c.b16 %v309, %v308
        %v332 = vpack.c.b16 %v311, %v310
        %v333 = vpack.c.b16 %v313, %v312
        %v334 = vpack.c.b16 %v315, %v314
        %v335 = vpack.c.b16 %v317, %v316
        %v336 = vpack.c.b16 %v319, %v318
        %v337 = vpack.c.b16 %v321, %v320
        %v338 = vpack.c.b16 %v323, %v322
        %v339 = vpack.c.b16 %v325, %v324
        %v340 = vpack.c.b16 %v327, %v326
        %v341 = vpack.c.b16 %v329, %v328
        %v355 = vsel %vm254, %v253, 0
        %357 = vmatprep.subr.bf16.mxu0 0
        %358 = vmatpush1.bf16.msra.mxu0 %v337
        %359 = vmatprep.subr.bf16.mxu0 0
        %360 = vmatpush1.bf16.msra.mxu0 %v336
        %361 = vmatprep.subr.bf16.mxu0 0
        %362 = vmatpush1.bf16.msra.mxu0 %v335
        %363 = vmatprep.subr.bf16.mxu0 0
        %364 = vmatpush1.bf16.msra.mxu0 %v334
        %365 = vmatprep.subr.bf16.mxu0 0
        %366 = vmatpush1.bf16.msra.mxu0 %v333
        %367 = vmatprep.subr.bf16.mxu0 0
        %368 = vmatpush1.bf16.msra.mxu0 %v332
        %369 = vmatprep.subr.bf16.mxu0 0
        %370 = vmatpush1.bf16.msra.mxu0 %v331
        %371 = vmatprep.subr.bf16.mxu0 0
        %372 = vmatpush1.bf16.msra.mxu0 %v330
        %373 = vmatprep.subr.bf16.mxu0 0
        %374 = vmatpush2.bf16.msra.mxu0 0
        %375 = vmatprep.subr.bf16.mxu0 0
        %376 = vmatpush2.bf16.msra.mxu0 0
        %377 = vmatprep.subr.bf16.mxu0 0
        %378 = vmatpush2.bf16.msra.mxu0 0
        %379 = vmatprep.subr.bf16.mxu0 0
        %380 = vmatpush2.bf16.msra.mxu0 0
        %381 = vmatprep.subr.bf16.mxu0 0
        %382 = vmatpush2.bf16.msra.mxu0 %v341
        %383 = vmatprep.subr.bf16.mxu0 0
        %384 = vmatpush2.bf16.msra.mxu0 %v340
        %385 = vmatprep.subr.bf16.mxu0 0
        %386 = vmatpush2.bf16.msra.mxu0 %v339
        %387 = vmatprep.subr.bf16.mxu0 0
        %388 = vmatpush2.bf16.msra.mxu0 %v338
        %389 = vmatprep.mubr.bf16.mxu0 %v355
        %390 = vmatmul.mubr.bf16.gmra.mxu0 %v256
        %v391 = vpop.f32.mrf.mxu0
        %v392 = vadd.f32 0.0, %v391
        %v393 = vpop.f32.mrf.mxu0
        %v394 = vpop.f32.mrf.mxu0
        %v395 = vadd.f32 0.0, %v394
        %v396 = vpop.f32.mrf.mxu0
        %397 = vdwg.mxu0
        %v398 = vmax.f32 %v392, 0.0
        %v399 = vmax.f32 %v395, 0.0
        %400 = vst [vmem:[%s176] sm:$0xff] %v398
        %401 = vst [vmem:[%s176 + $0x8] sm:$0xff] %v399
        %s402 = sand.u32 %s75, 1
        %s403 = scalar_lea.sflag [#allocation5], %s402
        %s404 = sand.u32 %s75, 1
        %s405 = smul.addr %s404, 16
        %s406 = scalar_lea.vmem [#allocation8], %s405
        // Predicated region
        $region37: #{tpu_custom_call.1} parent=27 // pred_check
          %p407 = pneg %p85
        $region38: #{tpu_custom_call.1} parent=27 // pred_check_branch
          %409 = sbr.rel (%p407) target = $region40
        $region39: #{tpu_custom_call.1} parent=27 // pred_region
          %s411 = ssub.s32 256, 256
          %412 = vsyncadd %s403, %s411
          %s413 = smul.addr %s20, 2
          %s414 = smul.addr %s413, 128
          %s415 = scalar_lea.hbm %s2, %s414
          %s416 = sshll.u32 %s406, 4
          %s417 = int_to_ptr.vmem [resolvable:$true] %s416
          %422 = dma.vmem_to_hbm [thread:$0]  %s417, 256, %s415, %s403, 128, 128, 8
        $region40: #{tpu_custom_call.1} parent=27 // pred_fallthru
          _
      $region28: #{tpu_custom_call.1} parent=5 // pred_fallthru
        _
      %p423 = scmp.le.s32.totalorder 2, %s15
      // Predicated region
      $region41: #{tpu_custom_call.1} parent=5 // pred_check
        %p424 = pneg %p423
      $region42: #{tpu_custom_call.1} parent=5 // pred_check_branch
        %426 = sbr.rel (%p424) target = $region44
      $region43: #{tpu_custom_call.1} parent=5 // pred_region
        %s427 = ssub.s32 %s15, 2
        // Predicated region
        $region45: #{tpu_custom_call.1} parent=43 // pred_check
          %p428 = pneg %p91
        $region46: #{tpu_custom_call.1} parent=43 // pred_check_branch
          %430 = sbr.rel (%p428) target = $region48
        $region47: #{tpu_custom_call.1} parent=43 // pred_region
          %s431 = sand.u32 %s76, 1
          %s432 = scalar_lea.sflag [#allocation5], %s431
          %s433 = sand.u32 %s76, 1
          %s434 = smul.addr %s433, 16
          %s435 = scalar_lea.vmem [#allocation8], %s434
          %436 = dma.done %s432, 256
        $region48: #{tpu_custom_call.1} parent=43 // pred_fallthru
          _
      $region44: #{tpu_custom_call.1} parent=5 // pred_fallthru
        _
    $region6: #{tpu_custom_call.1} parent=1 // loop_footer
      %s19 = sadd.s32 1, %s15
    $region7: #{tpu_custom_call.1} parent=1 // loop_footer_branch
      %14 = sbr.rel target = $region3
    $region8: #{tpu_custom_call.1} parent=1 // loop_exit
      _
    %437 = vsyncpa [#allocation4], 1
    %s438 = scalar_lea.sflag [#allocation4], 1
    %439 = vsyncpa %s438, 1
    %440 = vsyncpa [#allocation7], 1
    %441 = vsyncpa [#allocation5], 1
    %s442 = scalar_lea.sflag [#allocation5], 1
    %443 = vsyncpa %s442, 1

</llo_original>
